<compile_context>
chip_gen: v7x
topology: tpu7x:2x2x1
jax: 0.10.0
libtpu: 0.0.40
codegen_flags: <defaults>
</compile_context>

<pallas_src>
import functools

import numpy as np
import jax
import jax.numpy as jnp
from jax.experimental import pallas as pl
from jax.experimental.pallas import tpu as pltpu


# --------------------------------------------------------------------------
# Small helpers
# --------------------------------------------------------------------------
def _round_up(x, m):
    return (x + m - 1) // m * m


def _sp(H, W):
    """Flat-padded spatial extent, rounded up to a sublane multiple."""
    return _round_up((H + 2) * (W + 2), 8)


@functools.lru_cache(maxsize=None)
def _interior_mask_np(H, W):
    """(SP, 1) f32 mask: 1.0 on interior pixels, 0.0 on border / pad rows."""
    Hp, Wp = H + 2, W + 2
    m = np.zeros((Hp, Wp), np.float32)
    m[1:H + 1, 1:W + 1] = 1.0
    m = m.reshape(Hp * Wp, 1)
    SP = _sp(H, W)
    if SP != Hp * Wp:
        m = np.pad(m, ((0, SP - Hp * Wp), (0, 0)))
    return m


@functools.lru_cache(maxsize=None)
def _roll_matches_numpy():
    """Probe pltpu.roll's direction once (eagerly, before any jit trace)."""
    def k(x_ref, o_ref):
        o_ref[...] = pltpu.roll(x_ref[...], 1, axis=0)

    x = jnp.arange(8 * 128, dtype=jnp.float32).reshape(8, 128)
    y = pl.pallas_call(k, out_shape=jax.ShapeDtypeStruct((8, 128), jnp.float32))(x)
    # np.roll semantics: y[1, 0] == x[0, 0] == 0.
    return bool(jax.device_get(y)[1, 0] == 0.0)


@functools.lru_cache(maxsize=None)
def _vmem_budget():
    """Per-generation VMEM budget for the kernel (≈3/4 of physical, <=96MiB)."""
    cap = 64 * 2 ** 20
    try:
        info = pltpu.get_tpu_info()
        cap = int(getattr(info, "vmem_capacity_bytes", cap)) or cap
    except Exception:
        pass
    return max(32 * 2 ** 20, min(cap * 3 // 4, 96 * 2 ** 20))


# --------------------------------------------------------------------------
# Pallas kernel: fused 3x3 conv (9 rolled matmul taps) + bias + activation
# --------------------------------------------------------------------------
def _conv3x3_kernel(x_ref, w_ref, b_ref, m_ref, o_ref, *acc,
                    SP, W, act, nk, numpy_roll):
    """x_ref: (1, SP, cin_t) bf16 flat-padded activations
       w_ref: (9, cin_t, cout_t) bf16 weights (BN scale folded in)
       b_ref: (1, cout_t) f32 folded bias
       m_ref: (SP, 1) f32 interior mask
       o_ref: (1, SP, cout_t) bf16 flat-padded output
       acc  : optional (SP, cout_t) f32 scratch when the Cin axis is tiled."""
    x = x_ref[0]                                     # (SP, cin_t) bf16
    total = None
    for t in range(9):
        dy, dx = divmod(t, 3)
        off = (dy - 1) * (W + 2) + (dx - 1)          # flat tap offset
        prod = jnp.dot(x, w_ref[t], preferred_element_type=jnp.float32)
        # Need acc[p] += prod[p + off].  A cyclic roll is exact on interior
        # pixels (p + off never wraps there); wrapped rows only land on the
        # border / pad rows, which the mask re-zeroes in the epilogue.
        if off == 0:
            shifted = prod
        else:
            shift = ((-off) if numpy_roll else off) % SP
            shifted = pltpu.roll(prod, shift, axis=0)
        total = shifted if total is None else total + shifted

    def epilogue(y):
        y = y + b_ref[...]                           # BN scale already in W
        if act == "relu":
            y = jnp.maximum(y, 0.0)
        elif act == "sigmoid":
            y = jax.nn.sigmoid(y)
        # Re-zero the 1-pixel border (and alignment pad rows) so this output
        # is directly usable as the zero-padded input of the next 3x3 conv.
        o_ref[0] = (y * m_ref[...]).astype(o_ref.dtype)

    if nk == 1:
        # Common case: Cin fits in one tile -> no accumulator round trip.
        epilogue(total)
    else:
        acc_ref = acc[0]
        ci = pl.program_id(2)

        @pl.when(ci == 0)
        def _():
            acc_ref[...] = total

        @pl.when(ci != 0)
        def _():
            acc_ref[...] = acc_ref[...] + total

        @pl.when(ci == nk - 1)
        def _():
            epilogue(acc_ref[...])


def _divisor_tiles(C, cap):
    """Multiples of 128 that divide C (descending, <= cap), else the full dim."""
    if C % 128 != 0:
        return [C]
    tiles = [t for t in range(min(C, cap), 0, -128) if C % t == 0]
    return tiles or [C]


def _select_tiles(SP, Cin, Cout, budget):
    """Largest channel tiles whose working set fits the VMEM budget."""
    cout_tiles = _divisor_tiles(Cout, 512)
    cin_tiles = _divisor_tiles(Cin, 1024)
    for ct in cout_tiles:
        for kt in cin_tiles:
            nk = Cin // kt
            need = ((SP * ct * 4 if nk > 1 else 0)   # f32 accumulator scratch
                    + 2 * SP * kt * 2                # double-buffered x
                    + 2 * SP * ct * 2                # double-buffered out
                    + 2 * 9 * kt * ct * 2            # double-buffered weights
                    + 8 * SP * ct * 4                # rolled-tap f32 temporaries
                    + 2 * ct * 4 + SP * 4)           # bias + mask
            if need <= budget:
                return kt, ct
    # TODO(synk): row-tile the spatial axis instead of shrinking channels here.
    return cin_tiles[-1], cout_tiles[-1]


@functools.lru_cache(maxsize=None)
def _build_conv_call(N, SP, W, Cin, Cout, act):
    budget = _vmem_budget()
    cin_t, cout_t = _select_tiles(SP, Cin, Cout, budget)
    assert Cin % cin_t == 0 and Cout % cout_t == 0   # no silent tail drop
    nk = Cin // cin_t
    # Grid order (cout, n, cin): the weight block index does not change with
    # n, so Pallas keeps the weight tile resident across the batch instead of
    # re-fetching it per image; the reduction (cin) axis stays innermost.
    grid = (Cout // cout_t, N, nk)
    kernel = functools.partial(_conv3x3_kernel, SP=SP, W=W, act=act, nk=nk,
                               numpy_roll=_roll_matches_numpy())
    scratch = [pltpu.VMEM((SP, cout_t), jnp.float32)] if nk > 1 else []
    return pl.pallas_call(
        kernel,
        out_shape=jax.ShapeDtypeStruct((N, SP, Cout), jnp.bfloat16),
        grid_spec=pltpu.PrefetchScalarGridSpec(
            num_scalar_prefetch=0,
            grid=grid,
            in_specs=[
                pl.BlockSpec((1, SP, cin_t), lambda co, n, ci: (n, 0, ci)),
                pl.BlockSpec((9, cin_t, cout_t), lambda co, n, ci: (0, ci, co)),
                pl.BlockSpec((1, cout_t), lambda co, n, ci: (0, co)),
                pl.BlockSpec((SP, 1), lambda co, n, ci: (0, 0)),
            ],
            out_specs=pl.BlockSpec((1, SP, cout_t),
                                   lambda co, n, ci: (n, 0, co)),
            scratch_shapes=scratch,
        ),
        compiler_params=pltpu.CompilerParams(
            dimension_semantics=("parallel", "parallel", "arbitrary"),
            vmem_limit_bytes=budget,
        ),
    )


def conv3x3_block(params, xf, H, W):
    """One conv_block on a flat-padded (N, SP, Cin) bf16 tensor."""
    N, SP, Cin = xf.shape
    assert SP == _sp(H, W)
    assert Cin == params["w"].shape[1], (Cin, params["w"].shape)
    Cout = params["w"].shape[-1]
    f = _build_conv_call(N, SP, W, Cin, Cout, params["act"])
    mask = jnp.asarray(_interior_mask_np(H, W))
    return f(xf.astype(jnp.bfloat16), params["w"], params["bias"], mask)


# --------------------------------------------------------------------------
# Thin plain-JAX layout glue (pad/unpad, pooling, bilinear upsample, concat)
# --------------------------------------------------------------------------
def to_fp(x):
    """Interior NHWC -> flat zero-padded (N, SP, C) bf16."""
    N, H, W, C = x.shape
    xp = jnp.pad(x.astype(jnp.bfloat16), ((0, 0), (1, 1), (1, 1), (0, 0)))
    xf = xp.reshape(N, (H + 2) * (W + 2), C)
    SP = _sp(H, W)
    if SP != (H + 2) * (W + 2):
        xf = jnp.pad(xf, ((0, 0), (0, SP - (H + 2) * (W + 2)), (0, 0)))
    return xf


def from_fp(xf, H, W):
    """Flat zero-padded -> interior NHWC."""
    N, _, C = xf.shape
    S = (H + 2) * (W + 2)
    return xf[:, :S, :].reshape(N, H + 2, W + 2, C)[:, 1:H + 1, 1:W + 1, :]


def max_pool(x, k):
    N, H, W, C = x.shape
    return jnp.max(x.reshape(N, H // k, k, W // k, k, C), axis=(2, 4))


def bilinear_up(x, scale):
    """F.interpolate(scale_factor=scale, mode='bilinear', align_corners=True)."""
    N, h, w, C = x.shape
    H, W = h * scale, w * scale

    def coords(out, inp):
        if inp == 1:
            z = jnp.zeros((out,), jnp.int32)
            return z, z, jnp.zeros((out,), jnp.float32)
        src = jnp.arange(out, dtype=jnp.float32) * (inp - 1) / (out - 1)
        i0 = jnp.clip(jnp.floor(src).astype(jnp.int32), 0, inp - 2)
        frac = src - i0.astype(jnp.float32)
        return i0, i0 + 1, frac

    yi0, yi1, yf = coords(H, h)
    xi0, xi1, xf = coords(W, w)
    yf = yf.astype(x.dtype)
    xf = xf.astype(x.dtype)
    rows = (x[:, yi0] * (1.0 - yf)[None, :, None, None]
            + x[:, yi1] * yf[None, :, None, None])
    out = (rows[:, :, xi0] * (1.0 - xf)[None, None, :, None]
           + rows[:, :, xi1] * xf[None, None, :, None])
    return out


# --------------------------------------------------------------------------
# Parameter init (deterministic, synthetic).  BatchNorm runs in eval mode and
# is folded: the scale goes into the conv weights, the shift into the bias.
# Channel padding (pad_in_to / pad_out_to) keeps every conv lane-dense; the
# padded channels are exactly zero through ReLU, so the math is unchanged.
# --------------------------------------------------------------------------
def _init_conv_block(key, in_c, out_c, act=True, pad_in_to=None, pad_out_to=None):
    kw, kb, kg, kbe, km, kv = jax.random.split(key, 6)
    w = jax.random.normal(kw, (3, 3, in_c, out_c), jnp.float32) / np.sqrt(9 * in_c)
    b = 0.01 * jax.random.normal(kb, (out_c,), jnp.float32)
    if act:
        gamma = 1.0 + 0.1 * jax.random.normal(kg, (out_c,), jnp.float32)
        beta = 0.1 * jax.random.normal(kbe, (out_c,), jnp.float32)
        mean = 0.1 * jax.random.normal(km, (out_c,), jnp.float32)
        var = 1.0 + 0.1 * jnp.abs(jax.random.normal(kv, (out_c,), jnp.float32))
        scale = gamma / jnp.sqrt(var + 1e-5)
        bias = beta + scale * (b - mean)
        w = w * scale                        # fold BN scale into the weights
        activation = "relu"
    else:
        bias = b
        activation = "none"
    if pad_in_to is not None and pad_in_to > in_c:
        # consumer of a lane-padded input: zero weight rows for pad channels
        w = jnp.pad(w, ((0, 0), (0, 0), (0, pad_in_to - in_c), (0, 0)))
        in_c = pad_in_to
    if pad_out_to is not None and pad_out_to > out_c:
        # lane-dense output: extra zero output channels (stay zero after ReLU)
        w = jnp.pad(w, ((0, 0), (0, 0), (0, 0), (0, pad_out_to - out_c)))
        bias = jnp.pad(bias, ((0, pad_out_to - out_c),))
        out_c = pad_out_to
    return {"w": w.reshape(9, in_c, out_c).astype(jnp.bfloat16),
            "bias": bias.reshape(1, out_c).astype(jnp.float32),
            "act": activation}


def init_unet3plus(key, num_classes=1):
    _roll_matches_numpy()                    # probe roll direction eagerly
    keys = iter(jax.random.split(key, 48))
    cb = lambda i, o, **kw: _init_conv_block(next(keys), i, o, **kw)
    P = {}
    # Encoder.  Stage-1 (Cout=64) is lane-padded to 128 like every other
    # 64-channel conv; its consumers carry matching zero weight rows.
    P["e1"] = [cb(3, 64, pad_out_to=128),
               cb(64, 64, pad_in_to=128, pad_out_to=128)]
    P["e2"] = [cb(64, 128, pad_in_to=128), cb(128, 128)]
    P["e3"] = [cb(128, 256), cb(256, 256)]
    P["e4"] = [cb(256, 512), cb(512, 512)]
    P["e5"] = [cb(512, 1024), cb(1024, 1024)]
    # Decoder 4 branch convs (all 64-out, lane-padded to 128).
    P["e1_d4"] = cb(64, 64, pad_in_to=128, pad_out_to=128)
    P["e2_d4"] = cb(128, 64, pad_out_to=128)
    P["e3_d4"] = cb(256, 64, pad_out_to=128)
    P["e4_d4"] = cb(512, 64, pad_out_to=128)
    P["e5_d4"] = cb(1024, 64, pad_out_to=128)
    P["d4"] = cb(320, 64, pad_in_to=384, pad_out_to=128)
    # Decoder 3
    P["e1_d3"] = cb(64, 64, pad_in_to=128, pad_out_to=128)
    P["e2_d3"] = cb(128, 64, pad_out_to=128)
    P["e3_d3"] = cb(256, 64, pad_out_to=128)
    P["e4_d3"] = cb(64, 64, pad_in_to=128, pad_out_to=128)
    P["e5_d3"] = cb(1024, 64, pad_out_to=128)
    P["d3"] = cb(320, 64, pad_in_to=384, pad_out_to=128)
    # Decoder 2
    P["e1_d2"] = cb(64, 64, pad_in_to=128, pad_out_to=128)
    P["e2_d2"] = cb(128, 64, pad_out_to=128)
    P["e3_d2"] = cb(64, 64, pad_in_to=128, pad_out_to=128)
    P["e4_d2"] = cb(64, 64, pad_in_to=128, pad_out_to=128)
    P["e5_d2"] = cb(1024, 64, pad_out_to=128)
    P["d2"] = cb(320, 64, pad_in_to=384, pad_out_to=128)
    # Decoder 1
    P["e1_d1"] = cb(64, 64, pad_in_to=128, pad_out_to=128)
    P["e2_d1"] = cb(64, 64, pad_in_to=128, pad_out_to=128)
    P["e3_d1"] = cb(64, 64, pad_in_to=128, pad_out_to=128)
    P["e4_d1"] = cb(64, 64, pad_in_to=128, pad_out_to=128)
    P["e5_d1"] = cb(1024, 64, pad_out_to=128)
    P["d1"] = cb(320, 64, pad_in_to=384, pad_out_to=128)
    # Output head: conv y1 followed by sigmoid (applied in the kernel).
    P["y1"] = cb(64, num_classes, act=False, pad_in_to=128, pad_out_to=128)
    P["y1"]["act"] = "sigmoid"
    return P


# --------------------------------------------------------------------------
# Forward pass (mirrors unet3plus.forward)
# --------------------------------------------------------------------------
def unet3plus_forward(P, x_nchw, num_classes=1):
    x = jnp.transpose(x_nchw, (0, 2, 3, 1))          # NCHW -> NHWC
    N, H, W, _ = x.shape
    assert H % 16 == 0 and W % 16 == 0
    H1, W1 = H, W
    H2, W2 = H // 2, W // 2
    H3, W3 = H // 4, W // 4
    H4, W4 = H // 8, W // 8
    H5, W5 = H // 16, W // 16

    def seq(plist, xf, h, w):
        for p in plist:
            xf = conv3x3_block(p, xf, h, w)
        return xf

    def cat5(branches):
        # Branch outputs are lane-padded to 128; real data lives in [:64].
        # Slice back to 5x64 and pad to 384 (=3x128) so the fusion-conv
        # contraction dim is lane-dense; the fusion weights carry zero rows.
        parts = [b[..., :64] for b in branches]
        parts.append(jnp.zeros_like(parts[0]))
        return jnp.concatenate(parts, axis=-1)

    # ---------------- Encoder ----------------------------------------------
    e1f = seq(P["e1"], to_fp(x), H1, W1)
    e1 = from_fp(e1f, H1, W1)
    e2f = seq(P["e2"], to_fp(max_pool(e1, 2)), H2, W2)
    e2 = from_fp(e2f, H2, W2)
    e3f = seq(P["e3"], to_fp(max_pool(e2, 2)), H3, W3)
    e3 = from_fp(e3f, H3, W3)
    e4f = seq(P["e4"], to_fp(max_pool(e3, 2)), H4, W4)
    e4 = from_fp(e4f, H4, W4)
    # ---------------- Bottleneck -------------------------------------------
    e5f = seq(P["e5"], to_fp(max_pool(e4, 2)), H5, W5)
    e5 = from_fp(e5f, H5, W5)

    # ---------------- Decoder 4 (H4 x W4) ----------------------------------
    e1_d4 = conv3x3_block(P["e1_d4"], to_fp(max_pool(e1, 8)), H4, W4)
    e2_d4 = conv3x3_block(P["e2_d4"], to_fp(max_pool(e2, 4)), H4, W4)
    e3_d4 = conv3x3_block(P["e3_d4"], to_fp(max_pool(e3, 2)), H4, W4)
    e4_d4 = conv3x3_block(P["e4_d4"], e4f, H4, W4)
    e5_d4 = conv3x3_block(P["e5_d4"], to_fp(bilinear_up(e5, 2)), H4, W4)
    d4f = conv3x3_block(P["d4"], cat5([e1_d4, e2_d4, e3_d4, e4_d4, e5_d4]),
                        H4, W4)
    d4 = from_fp(d4f, H4, W4)

    # ---------------- Decoder 3 (H3 x W3) ----------------------------------
    e1_d3 = conv3x3_block(P["e1_d3"], to_fp(max_pool(e1, 4)), H3, W3)
    e2_d3 = conv3x3_block(P["e2_d3"], to_fp(max_pool(e2, 2)), H3, W3)
    e3_d3 = conv3x3_block(P["e3_d3"], e3f, H3, W3)
    e4_d3 = conv3x3_block(P["e4_d3"], to_fp(bilinear_up(d4, 2)), H3, W3)
    e5_d3 = conv3x3_block(P["e5_d3"], to_fp(bilinear_up(e5, 4)), H3, W3)
    d3f = conv3x3_block(P["d3"], cat5([e1_d3, e2_d3, e3_d3, e4_d3, e5_d3]),
                        H3, W3)
    d3 = from_fp(d3f, H3, W3)

    # ---------------- Decoder 2 (H2 x W2) ----------------------------------
    e1_d2 = conv3x3_block(P["e1_d2"], to_fp(max_pool(e1, 2)), H2, W2)
    e2_d2 = conv3x3_block(P["e2_d2"], e2f, H2, W2)
    e3_d2 = conv3x3_block(P["e3_d2"], to_fp(bilinear_up(d3, 2)), H2, W2)
    e4_d2 = conv3x3_block(P["e4_d2"], to_fp(bilinear_up(d4, 4)), H2, W2)
    e5_d2 = conv3x3_block(P["e5_d2"], to_fp(bilinear_up(e5, 8)), H2, W2)
    d2f = conv3x3_block(P["d2"], cat5([e1_d2, e2_d2, e3_d2, e4_d2, e5_d2]),
                        H2, W2)
    d2 = from_fp(d2f, H2, W2)

    # ---------------- Decoder 1 (H1 x W1) ----------------------------------
    e1_d1 = conv3x3_block(P["e1_d1"], e1f, H1, W1)
    e2_d1 = conv3x3_block(P["e2_d1"], to_fp(bilinear_up(d2, 2)), H1, W1)
    e3_d1 = conv3x3_block(P["e3_d1"], to_fp(bilinear_up(d3, 4)), H1, W1)
    e4_d1 = conv3x3_block(P["e4_d1"], to_fp(bilinear_up(d4, 8)), H1, W1)
    e5_d1 = conv3x3_block(P["e5_d1"], to_fp(bilinear_up(e5, 16)), H1, W1)
    d1f = conv3x3_block(P["d1"], cat5([e1_d1, e2_d1, e3_d1, e4_d1, e5_d1]),
                        H1, W1)

    # ---------------- Output -----------------------------------------------
    y1f = conv3x3_block(P["y1"], d1f, H1, W1)        # sigmoid in the kernel
    y1 = from_fp(y1f, H1, W1)[..., :num_classes]
    return jnp.transpose(y1, (0, 3, 1, 2)).astype(jnp.float32)  # -> NCHW


# --------------------------------------------------------------------------
if __name__ == "__main__":
    key = jax.random.PRNGKey(0)
    pkey, xkey = jax.random.split(key)
    num_classes = 1
    params = init_unet3plus(pkey, num_classes=num_classes)

    # NCHW like the PyTorch module: 3 input channels, spatial divisible by 16.
    # batch = 2 so a "parallel" grid axis feeds both v7x TensorCores.
    x = jax.random.normal(xkey, (2, 3, 32, 32), jnp.float32)

    fwd = jax.jit(functools.partial(unet3plus_forward, params,
                                    num_classes=num_classes))
    y = jax.block_until_ready(fwd(x))

    assert y.shape == (2, num_classes, 32, 32), y.shape
    assert bool(jnp.all(jnp.isfinite(y)))
    assert bool(jnp.all((y >= 0.0) & (y <= 1.0)))     # sigmoid output range
    print("KERNEL_OK")
</pallas_src>

<mosaic_0001>
module attributes {stable_mosaic.version = 11 : i64} {
  func.func @k(%arg0: memref<8x128xf32, #tpu.memory_space<vmem>>, %arg1: memref<8x128xf32, #tpu.memory_space<vmem>>) attributes {dimension_semantics = [], scalar_prefetch = 0 : i64, scratch_operands = 0 : i64, tpu.core_type = #tpu.core_type<tc>} {
    %c0 = arith.constant 0 : index
    %c0_0 = arith.constant 0 : index
    %0 = vector.load %arg0[%c0, %c0_0] : memref<8x128xf32, #tpu.memory_space<vmem>>, vector<8x128xf32>
    %c1_i32 = arith.constant 1 : i32
    %1 = tpu.dynamic_rotate %0 by %c1_i32 dim 0 : vector<8x128xf32>, i32 -> vector<8x128xf32>
    %c0_1 = arith.constant 0 : index
    %c0_2 = arith.constant 0 : index
    %2 = vector.load %arg1[%c0_1, %c0_2] : memref<8x128xf32, #tpu.memory_space<vmem>>, vector<8x128xf32>
    tpu.vector_store %arg1[%c0_1, %c0_2], %1 {strides = array<i32>} : memref<8x128xf32, #tpu.memory_space<vmem>>, vector<8x128xf32>,
    return
  }
}

</mosaic_0001>

<llo_original>
// kernel: tpu_custom_call.1
$region0: #{tpu_custom_call.1}
  #allocation0 [shape = 'u32[]', space=smem, size = 0x4, offset = 0x4, fixed_abs, tag = 'smem constant byte address 0x4 - core index']
  #allocation1 [shape = 'u32[144,128]{1,0:T(1,128)}', space=vmem, size = 0x12000, scoped, tag = 'internal scratch']
  %s0 = inlined_call_operand.hbm [shape: f32[8,128], index: 0, kind: input, shape index: {}]
  %s1 = inlined_call_operand.hbm [shape: f32[8,128], index: 1, kind: output, shape index: {}]
  %s2 = sld [smem:[#allocation0]]
  $region18: #{tpu_custom_call.1} parent=0
    _
  %s4 = ssub.s32 1, %s2
  %s5 = scalar_select 0, %s4, %s2
  $region1: #{tpu_custom_call.1} parent=0
    #allocation2 [shape = 'u8[4096]{0}', space=vmem, size = 0x1000, scoped, tag = 'input window, operand 0, single buffered']
    #allocation3 [shape = 's32[1]{0}', space=sflag, size = 0x4, scoped, tag = 'scoped memory for tpu_custom_call.1']
    #allocation4 [shape = 's32[1]{0}', space=sflag, size = 0x4, scoped, tag = 'scoped memory for tpu_custom_call.1']
    #allocation5 [shape = 'u8[4096]{0}', space=vmem, size = 0x1000, scoped, tag = 'output window, operand 0, single buffered']
    %6 = vsyncpa [#allocation3], 0
    %7 = vsyncpa [#allocation4], 0
    // Predicated region
    $region2: #{tpu_custom_call.1} parent=1 // pred_check
      _
    $region3: #{tpu_custom_call.1} parent=1 // pred_check_branch
      %9 = sbr.rel (0) target = $region5
    $region4: #{tpu_custom_call.1} parent=1 // pred_region
      %s11 = ssub.s32 128, 128
      %12 = vsyncadd [#allocation3], %s11
      %s14 = sshll.u32 [#allocation2], 4
      %s15 = int_to_ptr.vmem [resolvable:$true] %s14
      %17 = dma.hbm_to_vmem [thread:$0]  %s0, 128, %s15, [#allocation3]
    $region5: #{tpu_custom_call.1} parent=1 // pred_fallthru
      _
    // Predicated region
    $region6: #{tpu_custom_call.1} parent=1 // pred_check
      _
    $region7: #{tpu_custom_call.1} parent=1 // pred_check_branch
      %19 = sbr.rel (0) target = $region9
    $region8: #{tpu_custom_call.1} parent=1 // pred_region
      %20 = dma.done [#allocation3], 128
    $region9: #{tpu_custom_call.1} parent=1 // pred_fallthru
      _
    %v21 = vld [vmem:[#allocation2] sm:$0xff]
    %v22 = vrot.slane %v21, 7
    %23 = vst [vmem:[#allocation5] sm:$0xff] %v22
    // Predicated region
    $region10: #{tpu_custom_call.1} parent=1 // pred_check
      _
    $region11: #{tpu_custom_call.1} parent=1 // pred_check_branch
      %25 = sbr.rel (0) target = $region13
    $region12: #{tpu_custom_call.1} parent=1 // pred_region
      %s27 = ssub.s32 128, 128
      %28 = vsyncadd [#allocation4], %s27
      %s30 = sshll.u32 [#allocation5], 4
      %s31 = int_to_ptr.vmem [resolvable:$true] %s30
      %33 = dma.vmem_to_hbm [thread:$0]  %s31, 128, %s1, [#allocation4]
    $region13: #{tpu_custom_call.1} parent=1 // pred_fallthru
      _
    // Predicated region
    $region14: #{tpu_custom_call.1} parent=1 // pred_check
      _
    $region15: #{tpu_custom_call.1} parent=1 // pred_check_branch
      %35 = sbr.rel (0) target = $region17
    $region16: #{tpu_custom_call.1} parent=1 // pred_region
      %36 = dma.done [#allocation4], 128
    $region17: #{tpu_custom_call.1} parent=1 // pred_fallthru
      _
    %37 = vsyncpa [#allocation3], 1
    %38 = vsyncpa [#allocation4], 1

</llo_original>
